<compile_context>
chip_gen: v5e
topology: v5e:2x2
jax: 0.10.0
libtpu: 0.0.40
codegen_flags: <defaults>
</compile_context>

<pallas_src>
import functools

import jax
import jax.numpy as jnp
from jax.experimental import pallas as pl
from jax.experimental.pallas import tpu as pltpu


def _round_up(x, m):
    return ((x + m - 1) // m) * m


def _num_tensorcores():
    """Best-effort TensorCore count of the local chip (v7x has 2, else 1)."""
    try:
        kind = jax.devices()[0].device_kind.lower()
    except Exception:
        return 1
    return 2 if ("v7" in kind or "tpu7" in kind) else 1


def _make_fcnet_kernel(depth, compute_dtype):
    """Kernel ref order: x_ref, w0, b0, ..., w_{d-1}, b_{d-1}, out_ref.

    Weights arrive already transposed to (in, out) in compute_dtype; biases
    are (1, out) f32 rows.  Matmuls accumulate in f32; tanh runs in f32.
    """

    def kernel(*refs):
        x_ref = refs[0]
        out_ref = refs[-1]
        param_refs = refs[1:-1]

        h = x_ref[...].astype(jnp.float32)
        for layer in range(depth):
            w = param_refs[2 * layer][...]                           # (in, out)
            b = param_refs[2 * layer + 1][...].astype(jnp.float32)   # (1, out)
            # MXU matmul, f32 accumulation, no in-kernel transpose.
            h = jnp.dot(h.astype(compute_dtype), w.astype(compute_dtype),
                        preferred_element_type=jnp.float32) + b
            if layer < depth - 1:
                h = jnp.tanh(h)                                      # EUP, f32
        out_ref[...] = h.astype(out_ref.dtype)

    return kernel


def prepare_fcnet_params(params, compute_dtype=jnp.bfloat16):
    """One-time param prep: transpose (out,in)->(in,out), lane-pad ONLY the
    internal hidden dims to multiples of 128.  The network input and final
    output keep their true widths (they become full-array block dims)."""
    dims = [params[0][0].shape[1]] + [w.shape[0] for w, _ in params]
    dims_p = [dims[0]] + [_round_up(d, 128) for d in dims[1:-1]] + [dims[-1]]

    prepared = []
    for l, (w, b) in enumerate(params):
        in_p, out_p = dims_p[l], dims_p[l + 1]
        wt = jnp.zeros((in_p, out_p), compute_dtype)
        wt = wt.at[: w.shape[1], : w.shape[0]].set(w.T.astype(compute_dtype))
        b = jnp.asarray(b).reshape(1, -1)
        bp = jnp.zeros((1, out_p), jnp.float32)
        bp = bp.at[:, : b.shape[-1]].set(b.astype(jnp.float32))
        prepared.append((wt, bp))
    return prepared


def fcnet_forward(x, prepared, *, block_batch=512, compute_dtype=jnp.bfloat16,
                  num_cores=None):
    """Fused FCNet forward pass.

    x:        [B, in_dim] float32
    prepared: output of prepare_fcnet_params (closed over as jit constants).
    """
    B, in_dim = x.shape
    depth = len(prepared)
    assert prepared[0][0].shape[0] == in_dim, "x feature dim mismatch"
    out_dim = prepared[-1][0].shape[1]

    if num_cores is None:
        num_cores = _num_tensorcores()

    # ---- batch tiling -------------------------------------------------------
    block_batch = max(block_batch, 8)
    if B <= num_cores * max(block_batch, 512):
        # Small batch: exactly one tile per TensorCore.
        if num_cores <= 1 or B <= 8:
            bm, B_pad = B, B          # block dim == full dim: always legal
        else:
            bm = max(8, _round_up(-(-B // num_cores), 8))
            B_pad = _round_up(B, bm)
    else:
        # Large batch: big sublane-aligned tiles (sweepable via block_batch).
        bm = _round_up(block_batch, 8)
        B_pad = _round_up(B, bm)
    grid = (B_pad // bm,)

    x_in = x if B_pad == B else jnp.zeros((B_pad, in_dim), x.dtype).at[:B].set(x)

    kernel = _make_fcnet_kernel(depth, compute_dtype)

    in_specs = [pl.BlockSpec((bm, in_dim), lambda i: (i, 0))]
    args = [x_in]
    for wt, bp in prepared:
        # Full array as one grid-invariant resident block.
        in_specs.append(pl.BlockSpec(wt.shape, lambda i: (0, 0)))
        in_specs.append(pl.BlockSpec(bp.shape, lambda i: (0, 0)))
        args.append(wt)
        args.append(bp)

    out_spec = pl.BlockSpec((bm, out_dim), lambda i: (i, 0))

    # Advisory cost estimate for XLA's scheduler.
    flops = 2 * B_pad * sum(w.shape[0] * w.shape[1] for w, _ in prepared)
    transcendentals = B_pad * sum(w.shape[1] for w, _ in prepared[:-1])
    param_bytes = sum(w.size * w.dtype.itemsize + b.size * b.dtype.itemsize
                      for w, b in prepared)
    io_bytes = (B_pad * in_dim + B_pad * out_dim) * x.dtype.itemsize
    bytes_accessed = param_bytes + io_bytes

    # VMEM estimate: double-buffered x/out tiles + double-buffered params.
    # Only bump the scoped limit when a wide config actually needs it
    # (matters first on v7x: 64 MiB physical, 32 MiB default scoped).
    vmem_est = 2 * (bm * (in_dim + out_dim) * 4) + 2 * param_bytes
    vmem_limit = int(min(2 * vmem_est, 110 * 2**20)) if vmem_est > 24 * 2**20 else None

    out = pl.pallas_call(
        kernel,
        out_shape=jax.ShapeDtypeStruct((B_pad, out_dim), x.dtype),
        grid_spec=pltpu.PrefetchScalarGridSpec(
            num_scalar_prefetch=0,
            grid=grid,
            in_specs=in_specs,
            out_specs=out_spec,
        ),
        compiler_params=pltpu.CompilerParams(
            dimension_semantics=("parallel",),
            vmem_limit_bytes=vmem_limit,
        ),
        cost_estimate=pl.CostEstimate(
            flops=flops,
            transcendentals=transcendentals,
            bytes_accessed=bytes_accessed,
        ),
    )(*args)

    return out if B_pad == B else out[:B]


def init_fcnet_params(layers, key):
    """Deterministic Xavier-uniform weights (gain=1), zero biases — matches
    FCNet.initialize_weights().  W in PyTorch layout (out, in)."""
    params = []
    for l in range(len(layers) - 1):
        fan_in, fan_out = layers[l], layers[l + 1]
        key, sub = jax.random.split(key)
        bound = jnp.sqrt(6.0 / (fan_in + fan_out))
        w = jax.random.uniform(
            sub, (fan_out, fan_in), dtype=jnp.float32, minval=-bound, maxval=bound
        )
        b = jnp.zeros((1, fan_out), dtype=jnp.float32)
        params.append((w, b))
    return params


def fcnet_reference(x, params):
    """Plain-JAX reference of the PyTorch forward pass."""
    depth = len(params)
    h = x
    for l, (w, b) in enumerate(params):
        h = h @ w.T + b.reshape(1, -1)
        if l < depth - 1:
            h = jnp.tanh(h)
    return h


if __name__ == "__main__":
    # MLP shapes implied by the module, e.g. layers = [32, 64, 64, 16].
    layers = [32, 64, 64, 16]
    batch = 256

    key = jax.random.PRNGKey(0)
    key, xkey = jax.random.split(key)
    x = jax.random.normal(xkey, (batch, layers[0]), dtype=jnp.float32)
    params = init_fcnet_params(layers, key)

    ref = fcnet_reference(x, params)

    # f32 MXU path — tight validation against the reference.
    prep_f32 = prepare_fcnet_params(params, compute_dtype=jnp.float32)
    run_f32 = jax.jit(functools.partial(
        fcnet_forward, prepared=prep_f32, compute_dtype=jnp.float32))
    out_f32 = jax.block_until_ready(run_f32(x))
    assert out_f32.shape == (batch, layers[-1])
    assert jnp.allclose(out_f32, ref, atol=1e-5, rtol=1e-5), "f32 mismatch vs reference"

    # bf16 MXU path (default fast path on v5e/v6e/v7x) — loose tolerance since
    # weights/activations are quantized to bf16 (f32 accumulation retained).
    prep_bf16 = prepare_fcnet_params(params, compute_dtype=jnp.bfloat16)
    run_bf16 = jax.jit(functools.partial(
        fcnet_forward, prepared=prep_bf16, compute_dtype=jnp.bfloat16))
    out_bf16 = jax.block_until_ready(run_bf16(x))
    assert out_bf16.shape == (batch, layers[-1])
    assert jnp.allclose(out_bf16, ref, atol=5e-2, rtol=5e-2), "bf16 mismatch vs reference"

    print("KERNEL_OK")
</pallas_src>

<mosaic_0001>
module attributes {stable_mosaic.version = 11 : i64} {
  func.func @kernel(%arg0: i32, %arg1: memref<256x32xf32, #tpu.memory_space<vmem>>, %arg2: memref<32x128xf32, #tpu.memory_space<vmem>>, %arg3: memref<1x128xf32, #tpu.memory_space<vmem>>, %arg4: memref<128x128xf32, #tpu.memory_space<vmem>>, %arg5: memref<1x128xf32, #tpu.memory_space<vmem>>, %arg6: memref<128x16xf32, #tpu.memory_space<vmem>>, %arg7: memref<1x16xf32, #tpu.memory_space<vmem>>, %arg8: memref<256x16xf32, #tpu.memory_space<vmem>>) attributes {dimension_semantics = [#tpu.dimension_semantics<parallel>], iteration_bounds = array<i64: 1>, scalar_prefetch = 0 : i64, scratch_operands = 0 : i64, tpu.core_type = #tpu.core_type<tc>, window_params = [{transform_indices = @transform_0, window_bounds = array<i64: 256, 32>}, {pipeline_mode = #tpu.pipeline_mode<synchronous>, transform_indices = @transform_1, window_bounds = array<i64: 32, 128>}, {pipeline_mode = #tpu.pipeline_mode<synchronous>, transform_indices = @transform_2, window_bounds = array<i64: 1, 128>}, {pipeline_mode = #tpu.pipeline_mode<synchronous>, transform_indices = @transform_3, window_bounds = array<i64: 128, 128>}, {pipeline_mode = #tpu.pipeline_mode<synchronous>, transform_indices = @transform_4, window_bounds = array<i64: 1, 128>}, {pipeline_mode = #tpu.pipeline_mode<synchronous>, transform_indices = @transform_5, window_bounds = array<i64: 128, 16>}, {pipeline_mode = #tpu.pipeline_mode<synchronous>, transform_indices = @transform_6, window_bounds = array<i64: 1, 16>}, {transform_indices = @transform_7, window_bounds = array<i64: 256, 16>}]} {
    %c0 = arith.constant 0 : index
    %c0_0 = arith.constant 0 : index
    %0 = vector.load %arg1[%c0, %c0_0] : memref<256x32xf32, #tpu.memory_space<vmem>>, vector<256x32xf32>
    %c0_1 = arith.constant 0 : index
    %c0_2 = arith.constant 0 : index
    %1 = vector.load %arg2[%c0_1, %c0_2] : memref<32x128xf32, #tpu.memory_space<vmem>>, vector<32x128xf32>
    %c0_3 = arith.constant 0 : index
    %c0_4 = arith.constant 0 : index
    %2 = vector.load %arg3[%c0_3, %c0_4] : memref<1x128xf32, #tpu.memory_space<vmem>>, vector<1x128xf32>
    %cst = arith.constant dense<0.000000e+00> : vector<256x128xf32>
    %3 = tpu.matmul %0, %1, %cst {dimension_numbers = #tpu.dot_dimension_numbers<[1], [0], [0], [1], [0, 0, 1, 1], [], []>} : vector<256x32xf32>, vector<32x128xf32>, vector<256x128xf32> -> vector<256x128xf32>
    %4 = vector.broadcast %2 : vector<1x128xf32> to vector<256x128xf32>
    %5 = arith.addf %3, %4 : vector<256x128xf32>
    %6 = math.tanh %5 : vector<256x128xf32>
    %c0_5 = arith.constant 0 : index
    %c0_6 = arith.constant 0 : index
    %7 = vector.load %arg4[%c0_5, %c0_6] : memref<128x128xf32, #tpu.memory_space<vmem>>, vector<128x128xf32>
    %c0_7 = arith.constant 0 : index
    %c0_8 = arith.constant 0 : index
    %8 = vector.load %arg5[%c0_7, %c0_8] : memref<1x128xf32, #tpu.memory_space<vmem>>, vector<1x128xf32>
    %cst_9 = arith.constant dense<0.000000e+00> : vector<256x128xf32>
    %9 = tpu.matmul %6, %7, %cst_9 {dimension_numbers = #tpu.dot_dimension_numbers<[1], [0], [0], [1], [0, 0, 1, 1], [], []>} : vector<256x128xf32>, vector<128x128xf32>, vector<256x128xf32> -> vector<256x128xf32>
    %10 = vector.broadcast %8 : vector<1x128xf32> to vector<256x128xf32>
    %11 = arith.addf %9, %10 : vector<256x128xf32>
    %12 = math.tanh %11 : vector<256x128xf32>
    %c0_10 = arith.constant 0 : index
    %c0_11 = arith.constant 0 : index
    %13 = vector.load %arg6[%c0_10, %c0_11] : memref<128x16xf32, #tpu.memory_space<vmem>>, vector<128x16xf32>
    %c0_12 = arith.constant 0 : index
    %c0_13 = arith.constant 0 : index
    %14 = vector.load %arg7[%c0_12, %c0_13] : memref<1x16xf32, #tpu.memory_space<vmem>>, vector<1x16xf32>
    %cst_14 = arith.constant dense<0.000000e+00> : vector<256x16xf32>
    %15 = tpu.matmul %12, %13, %cst_14 {dimension_numbers = #tpu.dot_dimension_numbers<[1], [0], [0], [1], [0, 0, 1, 1], [], []>} : vector<256x128xf32>, vector<128x16xf32>, vector<256x16xf32> -> vector<256x16xf32>
    %16 = vector.broadcast %14 : vector<1x16xf32> to vector<256x16xf32>
    %17 = arith.addf %15, %16 : vector<256x16xf32>
    %c0_15 = arith.constant 0 : index
    %c0_16 = arith.constant 0 : index
    %18 = vector.load %arg8[%c0_15, %c0_16] : memref<256x16xf32, #tpu.memory_space<vmem>>, vector<256x16xf32>
    tpu.vector_store %arg8[%c0_15, %c0_16], %17 {strides = array<i32>} : memref<256x16xf32, #tpu.memory_space<vmem>>, vector<256x16xf32>,
    return
  }
  func.func @transform_0(%arg0: i32) -> (i32, i32) {
    %c0_i32 = arith.constant 0 : i32
    %c0_i32_0 = arith.constant 0 : i32
    return %arg0, %c0_i32 : i32, i32
  }
  func.func @transform_1(%arg0: i32) -> (i32, i32) {
    %c0_i32 = arith.constant 0 : i32
    %c0_i32_0 = arith.constant 0 : i32
    %c0_i32_1 = arith.constant 0 : i32
    return %c0_i32, %c0_i32_0 : i32, i32
  }
  func.func @transform_2(%arg0: i32) -> (i32, i32) {
    %c0_i32 = arith.constant 0 : i32
    %c0_i32_0 = arith.constant 0 : i32
    %c0_i32_1 = arith.constant 0 : i32
    return %c0_i32, %c0_i32_0 : i32, i32
  }
  func.func @transform_3(%arg0: i32) -> (i32, i32) {
    %c0_i32 = arith.constant 0 : i32
    %c0_i32_0 = arith.constant 0 : i32
    %c0_i32_1 = arith.constant 0 : i32
    return %c0_i32, %c0_i32_0 : i32, i32
  }
  func.func @transform_4(%arg0: i32) -> (i32, i32) {
    %c0_i32 = arith.constant 0 : i32
    %c0_i32_0 = arith.constant 0 : i32
    %c0_i32_1 = arith.constant 0 : i32
    return %c0_i32, %c0_i32_0 : i32, i32
  }
  func.func @transform_5(%arg0: i32) -> (i32, i32) {
    %c0_i32 = arith.constant 0 : i32
    %c0_i32_0 = arith.constant 0 : i32
    %c0_i32_1 = arith.constant 0 : i32
    return %c0_i32, %c0_i32_0 : i32, i32
  }
  func.func @transform_6(%arg0: i32) -> (i32, i32) {
    %c0_i32 = arith.constant 0 : i32
    %c0_i32_0 = arith.constant 0 : i32
    %c0_i32_1 = arith.constant 0 : i32
    return %c0_i32, %c0_i32_0 : i32, i32
  }
  func.func @transform_7(%arg0: i32) -> (i32, i32) {
    %c0_i32 = arith.constant 0 : i32
    %c0_i32_0 = arith.constant 0 : i32
    return %arg0, %c0_i32 : i32, i32
  }
}

</mosaic_0001>

<llo_original>
// kernel: fcnet_forward.1
$region0: #{fcnet_forward.1}
  #allocation0 [shape = 'u32[]', space=smem, size = 0x4, offset = 0x4, fixed_abs, tag = 'smem constant byte address 0x4 - core index']
  #allocation1 [shape = 'u32[72,128]{1,0:T(1,128)}', space=vmem, size = 0x9000, scoped, tag = 'internal scratch']
  %s0 = inlined_call_operand.vmem [shape: f32[256,32], index: 0, kind: input, shape index: {}]
  %s1 = inlined_call_operand.vmem [shape: f32[32,128], index: 1, kind: input, shape index: {}]
  %s2 = inlined_call_operand.vmem [shape: f32[1,128], index: 2, kind: input, shape index: {}, may-alias: {2,4}]
  %s3 = inlined_call_operand.vmem [shape: f32[128,128], index: 3, kind: input, shape index: {}]
  %s4 = inlined_call_operand.vmem [shape: f32[1,128], index: 4, kind: input, shape index: {}, may-alias: {2,4}]
  %s5 = inlined_call_operand.vmem [shape: f32[128,16], index: 5, kind: input, shape index: {}]
  %s6 = inlined_call_operand.vmem [shape: f32[1,16], index: 6, kind: input, shape index: {}]
  %s7 = inlined_call_operand.vmem [shape: f32[256,16], index: 7, kind: output, shape index: {}]
  %s8 = sld [smem:[#allocation0]]
  $region38: #{fcnet_forward.1} parent=0
    _
  %s10 = ssub.s32 1, %s8
  %s11 = scalar_select 0, %s10, %s8
  // Predicated region
  $region2: #{fcnet_forward.1} parent=0 // pred_check
    _
  $region3: #{fcnet_forward.1} parent=0 // pred_check_branch
    %13 = sbr.rel (0) target = $region5
  $region4: #{fcnet_forward.1} parent=0 // pred_region
    _
  $region5: #{fcnet_forward.1} parent=0 // pred_fallthru
    _
  // Predicated region
  $region6: #{fcnet_forward.1} parent=0 // pred_check
    _
  $region7: #{fcnet_forward.1} parent=0 // pred_check_branch
    %15 = sbr.rel (0) target = $region9
  $region8: #{fcnet_forward.1} parent=0 // pred_region
    _
  $region9: #{fcnet_forward.1} parent=0 // pred_fallthru
    _
  // Predicated region
  $region10: #{fcnet_forward.1} parent=0 // pred_check
    _
  $region11: #{fcnet_forward.1} parent=0 // pred_check_branch
    %17 = sbr.rel (0) target = $region13
  $region12: #{fcnet_forward.1} parent=0 // pred_region
    _
  $region13: #{fcnet_forward.1} parent=0 // pred_fallthru
    _
  // Predicated region
  $region14: #{fcnet_forward.1} parent=0 // pred_check
    _
  $region15: #{fcnet_forward.1} parent=0 // pred_check_branch
    %19 = sbr.rel (0) target = $region17
  $region16: #{fcnet_forward.1} parent=0 // pred_region
    _
  $region17: #{fcnet_forward.1} parent=0 // pred_fallthru
    _
  // Predicated region
  $region18: #{fcnet_forward.1} parent=0 // pred_check
    _
  $region19: #{fcnet_forward.1} parent=0 // pred_check_branch
    %21 = sbr.rel (0) target = $region21
  $region20: #{fcnet_forward.1} parent=0 // pred_region
    _
  $region21: #{fcnet_forward.1} parent=0 // pred_fallthru
    _
  // Predicated region
  $region22: #{fcnet_forward.1} parent=0 // pred_check
    _
  $region23: #{fcnet_forward.1} parent=0 // pred_check_branch
    %23 = sbr.rel (0) target = $region25
  $region24: #{fcnet_forward.1} parent=0 // pred_region
    _
  $region25: #{fcnet_forward.1} parent=0 // pred_fallthru
    _
  // Predicated region
  $region26: #{fcnet_forward.1} parent=0 // pred_check
    _
  $region27: #{fcnet_forward.1} parent=0 // pred_check_branch
    %25 = sbr.rel (0) target = $region29
  $region28: #{fcnet_forward.1} parent=0 // pred_region
    _
  $region29: #{fcnet_forward.1} parent=0 // pred_fallthru
    _
  %v26 = vld [vmem:[%s0] sm:$0xff]
  %v27 = vld [vmem:[%s0 + $0x8] sm:$0xff]
  %v28 = vld [vmem:[%s0 + $0x10] sm:$0xff]
  %v29 = vld [vmem:[%s0 + $0x18] sm:$0xff]
  %v30 = vld [vmem:[%s0 + $0x20] sm:$0xff]
  %v31 = vld [vmem:[%s0 + $0x28] sm:$0xff]
  %v32 = vld [vmem:[%s0 + $0x30] sm:$0xff]
  %v33 = vld [vmem:[%s0 + $0x38] sm:$0xff]
  %v34 = vld [vmem:[%s0 + $0x40] sm:$0xff]
  %v35 = vld [vmem:[%s0 + $0x48] sm:$0xff]
  %v36 = vld [vmem:[%s0 + $0x50] sm:$0xff]
  %v37 = vld [vmem:[%s0 + $0x58] sm:$0xff]
  %v38 = vld [vmem:[%s0 + $0x60] sm:$0xff]
  %v39 = vld [vmem:[%s0 + $0x68] sm:$0xff]
  %v40 = vld [vmem:[%s0 + $0x70] sm:$0xff]
  %v41 = vld [vmem:[%s0 + $0x78] sm:$0xff]
  %v42 = vld [vmem:[%s0 + $0x80] sm:$0xff]
  %v43 = vld [vmem:[%s0 + $0x88] sm:$0xff]
  %v44 = vld [vmem:[%s0 + $0x90] sm:$0xff]
  %v45 = vld [vmem:[%s0 + $0x98] sm:$0xff]
  %v46 = vld [vmem:[%s0 + $0xa0] sm:$0xff]
  %v47 = vld [vmem:[%s0 + $0xa8] sm:$0xff]
  %v48 = vld [vmem:[%s0 + $0xb0] sm:$0xff]
  %v49 = vld [vmem:[%s0 + $0xb8] sm:$0xff]
  %v50 = vld [vmem:[%s0 + $0xc0] sm:$0xff]
  %v51 = vld [vmem:[%s0 + $0xc8] sm:$0xff]
  %v52 = vld [vmem:[%s0 + $0xd0] sm:$0xff]
  %v53 = vld [vmem:[%s0 + $0xd8] sm:$0xff]
  %v54 = vld [vmem:[%s0 + $0xe0] sm:$0xff]
  %v55 = vld [vmem:[%s0 + $0xe8] sm:$0xff]
  %v56 = vld [vmem:[%s0 + $0xf0] sm:$0xff]
  %v57 = vld [vmem:[%s0 + $0xf8] sm:$0xff]
  %v58 = vld [vmem:[%s1] sm:$0xff]
  %v59 = vld [vmem:[%s1 + $0x8] sm:$0xff]
  %v60 = vld [vmem:[%s1 + $0x10] sm:$0xff]
  %v61 = vld [vmem:[%s1 + $0x18] sm:$0xff]
  %v62 = vld [vmem:[%s2] sm:$0x1]
  %v64 = vperm.slane %v62, 0
  %vm66 = vcmask 261120
  %v68 = vsel %vm66, %v26, 0
  %v71 = vsel %vm66, %v27, 0
  %v74 = vsel %vm66, %v28, 0
  %v77 = vsel %vm66, %v29, 0
  %v80 = vsel %vm66, %v30, 0
  %v83 = vsel %vm66, %v31, 0
  %v86 = vsel %vm66, %v32, 0
  %v89 = vsel %vm66, %v33, 0
  %v92 = vsel %vm66, %v34, 0
  %v95 = vsel %vm66, %v35, 0
  %v98 = vsel %vm66, %v36, 0
  %v101 = vsel %vm66, %v37, 0
  %v104 = vsel %vm66, %v38, 0
  %v107 = vsel %vm66, %v39, 0
  %v110 = vsel %vm66, %v40, 0
  %v113 = vsel %vm66, %v41, 0
  %v116 = vsel %vm66, %v42, 0
  %v119 = vsel %vm66, %v43, 0
  %v122 = vsel %vm66, %v44, 0
  %v125 = vsel %vm66, %v45, 0
  %v128 = vsel %vm66, %v46, 0
  %v131 = vsel %vm66, %v47, 0
  %v134 = vsel %vm66, %v48, 0
  %v137 = vsel %vm66, %v49, 0
  %v140 = vsel %vm66, %v50, 0
  %v143 = vsel %vm66, %v51, 0
  %v146 = vsel %vm66, %v52, 0
  %v149 = vsel %vm66, %v53, 0
  %v152 = vsel %vm66, %v54, 0
  %v155 = vsel %vm66, %v55, 0
  %v158 = vsel %vm66, %v56, 0
  %v161 = vsel %vm66, %v57, 0
  %163 = vmatpush.msra.mxu0 0.0
  %164 = vmatpush.msra.mxu0 0.0
  %165 = vmatpush.msra.mxu0 0.0
  %166 = vmatpush.msra.mxu0 0.0
  %167 = vmatpush.msra.mxu0 0.0
  %168 = vmatpush.msra.mxu0 0.0
  %169 = vmatpush.msra.mxu0 0.0
  %170 = vmatpush.msra.mxu0 0.0
  %171 = vmatpush.msra.mxu0 0.0
  %172 = vmatpush.msra.mxu0 0.0
  %173 = vmatpush.msra.mxu0 0.0
  %174 = vmatpush.msra.mxu0 0.0
  %175 = vmatpush.msra.mxu0 %v61
  %176 = vmatpush.msra.mxu0 %v60
  %177 = vmatpush.msra.mxu0 %v59
  %178 = vmatpush.msra.mxu0 %v58
  %179 = vmatmul.f32.gmra.mxu0 %v68
  %v180 = vpop.f32.mrf.mxu0
  %v181 = vadd.f32 %v64, %v180
  %182 = vmatmul.f32.gmra.mxu0 %v71
  %v183 = vpop.f32.mrf.mxu0
  %v184 = vadd.f32 %v64, %v183
  %185 = vmatmul.f32.gmra.mxu0 %v74
  %v186 = vpop.f32.mrf.mxu0
  %v187 = vadd.f32 %v64, %v186
  %188 = vmatmul.f32.gmra.mxu0 %v77
  %v189 = vpop.f32.mrf.mxu0
  %v190 = vadd.f32 %v64, %v189
  %191 = vmatmul.f32.gmra.mxu0 %v80
  %v192 = vpop.f32.mrf.mxu0
  %v193 = vadd.f32 %v64, %v192
  %194 = vmatmul.f32.gmra.mxu0 %v83
  %v195 = vpop.f32.mrf.mxu0
  %v196 = vadd.f32 %v64, %v195
  %197 = vmatmul.f32.gmra.mxu0 %v86
  %v198 = vpop.f32.mrf.mxu0
  %v199 = vadd.f32 %v64, %v198
  %200 = vmatmul.f32.gmra.mxu0 %v89
  %v201 = vpop.f32.mrf.mxu0
  %v202 = vadd.f32 %v64, %v201
  %203 = vmatmul.f32.gmra.mxu0 %v92
  %v204 = vpop.f32.mrf.mxu0
  %v205 = vadd.f32 %v64, %v204
  %206 = vmatmul.f32.gmra.mxu0 %v95
  %v207 = vpop.f32.mrf.mxu0
  %v208 = vadd.f32 %v64, %v207
  %209 = vmatmul.f32.gmra.mxu0 %v98
  %v210 = vpop.f32.mrf.mxu0
  %v211 = vadd.f32 %v64, %v210
  %212 = vmatmul.f32.gmra.mxu0 %v101
  %v213 = vpop.f32.mrf.mxu0
  %v214 = vadd.f32 %v64, %v213
  %215 = vmatmul.f32.gmra.mxu0 %v104
  %v216 = vpop.f32.mrf.mxu0
  %v217 = vadd.f32 %v64, %v216
  %218 = vmatmul.f32.gmra.mxu0 %v107
  %v219 = vpop.f32.mrf.mxu0
  %v220 = vadd.f32 %v64, %v219
  %221 = vmatmul.f32.gmra.mxu0 %v110
  %v222 = vpop.f32.mrf.mxu0
  %v223 = vadd.f32 %v64, %v222
  %224 = vmatmul.f32.gmra.mxu0 %v113
  %v225 = vpop.f32.mrf.mxu0
  %v226 = vadd.f32 %v64, %v225
  %227 = vmatmul.f32.gmra.mxu0 %v116
  %v228 = vpop.f32.mrf.mxu0
  %v229 = vadd.f32 %v64, %v228
  %230 = vmatmul.f32.gmra.mxu0 %v119
  %v231 = vpop.f32.mrf.mxu0
  %v232 = vadd.f32 %v64, %v231
  %233 = vmatmul.f32.gmra.mxu0 %v122
  %v234 = vpop.f32.mrf.mxu0
  %v235 = vadd.f32 %v64, %v234
  %236 = vmatmul.f32.gmra.mxu0 %v125
  %v237 = vpop.f32.mrf.mxu0
  %v238 = vadd.f32 %v64, %v237
  %239 = vmatmul.f32.gmra.mxu0 %v128
  %v240 = vpop.f32.mrf.mxu0
  %v241 = vadd.f32 %v64, %v240
  %242 = vmatmul.f32.gmra.mxu0 %v131
  %v243 = vpop.f32.mrf.mxu0
  %v244 = vadd.f32 %v64, %v243
  %245 = vmatmul.f32.gmra.mxu0 %v134
  %v246 = vpop.f32.mrf.mxu0
  %v247 = vadd.f32 %v64, %v246
  %248 = vmatmul.f32.gmra.mxu0 %v137
  %v249 = vpop.f32.mrf.mxu0
  %v250 = vadd.f32 %v64, %v249
  %251 = vmatmul.f32.gmra.mxu0 %v140
  %v252 = vpop.f32.mrf.mxu0
  %v253 = vadd.f32 %v64, %v252
  %254 = vmatmul.f32.gmra.mxu0 %v143
  %v255 = vpop.f32.mrf.mxu0
  %v256 = vadd.f32 %v64, %v255
  %257 = vmatmul.f32.gmra.mxu0 %v146
  %v258 = vpop.f32.mrf.mxu0
  %v259 = vadd.f32 %v64, %v258
  %260 = vmatmul.f32.gmra.mxu0 %v149
  %v261 = vpop.f32.mrf.mxu0
  %v262 = vadd.f32 %v64, %v261
  %263 = vmatmul.f32.gmra.mxu0 %v152
  %v264 = vpop.f32.mrf.mxu0
  %v265 = vadd.f32 %v64, %v264
  %266 = vmatmul.f32.gmra.mxu0 %v155
  %v267 = vpop.f32.mrf.mxu0
  %v268 = vadd.f32 %v64, %v267
  %269 = vmatmul.f32.gmra.mxu0 %v158
  %v270 = vpop.f32.mrf.mxu0
  %v271 = vadd.f32 %v64, %v270
  %272 = vmatmul.f32.gmra.mxu0 %v161
  %v273 = vpop.f32.mrf.mxu0
  %v274 = vadd.f32 %v64, %v273
  %275 = vdwg.mxu0
  %v276 = vtanh.pop %v181
  %v277 = vtanh.pop %v184
  %v278 = vtanh.pop %v187
  %v279 = vtanh.pop %v190
  %v280 = vtanh.pop %v193
  %v281 = vtanh.pop %v196
  %v282 = vtanh.pop %v199
  %v283 = vtanh.pop %v202
  %v284 = vtanh.pop %v205
  %v285 = vtanh.pop %v208
  %v286 = vtanh.pop %v211
  %v287 = vtanh.pop %v214
  %v288 = vtanh.pop %v217
  %v289 = vtanh.pop %v220
  %v290 = vtanh.pop %v223
  %v291 = vtanh.pop %v226
  %v292 = vtanh.pop %v229
  %v293 = vtanh.pop %v232
  %v294 = vtanh.pop %v235
  %v295 = vtanh.pop %v238
  %v296 = vtanh.pop %v241
  %v297 = vtanh.pop %v244
  %v298 = vtanh.pop %v247
  %v299 = vtanh.pop %v250
  %v300 = vtanh.pop %v253
  %v301 = vtanh.pop %v256
  %v302 = vtanh.pop %v259
  %v303 = vtanh.pop %v262
  %v304 = vtanh.pop %v265
  %v305 = vtanh.pop %v268
  %v306 = vtanh.pop %v271
  %v307 = vtanh.pop %v274
  %v308 = vld [vmem:[%s3] sm:$0xff]
  %v309 = vld [vmem:[%s3 + $0x8] sm:$0xff]
  %v310 = vld [vmem:[%s3 + $0x10] sm:$0xff]
  %v311 = vld [vmem:[%s3 + $0x18] sm:$0xff]
  %v312 = vld [vmem:[%s3 + $0x20] sm:$0xff]
  %v313 = vld [vmem:[%s3 + $0x28] sm:$0xff]
  %v314 = vld [vmem:[%s3 + $0x30] sm:$0xff]
  %v315 = vld [vmem:[%s3 + $0x38] sm:$0xff]
  %v316 = vld [vmem:[%s3 + $0x40] sm:$0xff]
  %v317 = vld [vmem:[%s3 + $0x48] sm:$0xff]
  %v318 = vld [vmem:[%s3 + $0x50] sm:$0xff]
  %v319 = vld [vmem:[%s3 + $0x58] sm:$0xff]
  %v320 = vld [vmem:[%s3 + $0x60] sm:$0xff]
  %v321 = vld [vmem:[%s3 + $0x68] sm:$0xff]
  %v322 = vld [vmem:[%s3 + $0x70] sm:$0xff]
  %v323 = vld [vmem:[%s3 + $0x78] sm:$0xff]
  %v324 = vld [vmem:[%s4] sm:$0x1]
  %v326 = vperm.slane %v324, 0
  %328 = vmatpush.msra.mxu0 %v323
  %329 = vmatpush.msra.mxu0 %v322
  %330 = vmatpush.msra.mxu0 %v321
  %331 = vmatpush.msra.mxu0 %v320
  %332 = vmatpush.msra.mxu0 %v319
  %333 = vmatpush.msra.mxu0 %v318
  %334 = vmatpush.msra.mxu0 %v317
  %335 = vmatpush.msra.mxu0 %v316
  %336 = vmatpush.msra.mxu0 %v315
  %337 = vmatpush.msra.mxu0 %v314
  %338 = vmatpush.msra.mxu0 %v313
  %339 = vmatpush.msra.mxu0 %v312
  %340 = vmatpush.msra.mxu0 %v311
  %341 = vmatpush.msra.mxu0 %v310
  %342 = vmatpush.msra.mxu0 %v309
  %343 = vmatpush.msra.mxu0 %v308
  %344 = vmatmul.f32.gmra.mxu0 %v276
  %v345 = vpop.f32.mrf.mxu0
  %v346 = vadd.f32 %v326, %v345
  %347 = vmatmul.f32.gmra.mxu0 %v277
  %v348 = vpop.f32.mrf.mxu0
  %v349 = vadd.f32 %v326, %v348
  %350 = vmatmul.f32.gmra.mxu0 %v278
  %v351 = vpop.f32.mrf.mxu0
  %v352 = vadd.f32 %v326, %v351
  %353 = vmatmul.f32.gmra.mxu0 %v279
  %v354 = vpop.f32.mrf.mxu0
  %v355 = vadd.f32 %v326, %v354
  %356 = vmatmul.f32.gmra.mxu0 %v280
  %v357 = vpop.f32.mrf.mxu0
  %v358 = vadd.f32 %v326, %v357
  %359 = vmatmul.f32.gmra.mxu0 %v281
  %v360 = vpop.f32.mrf.mxu0
  %v361 = vadd.f32 %v326, %v360
  %362 = vmatmul.f32.gmra.mxu0 %v282
  %v363 = vpop.f32.mrf.mxu0
  %v364 = vadd.f32 %v326, %v363
  %365 = vmatmul.f32.gmra.mxu0 %v283
  %v366 = vpop.f32.mrf.mxu0
  %v367 = vadd.f32 %v326, %v366
  %368 = vmatmul.f32.gmra.mxu0 %v284
  %v369 = vpop.f32.mrf.mxu0
  %v370 = vadd.f32 %v326, %v369
  %371 = vmatmul.f32.gmra.mxu0 %v285
  %v372 = vpop.f32.mrf.mxu0
  %v373 = vadd.f32 %v326, %v372
  %374 = vmatmul.f32.gmra.mxu0 %v286
  %v375 = vpop.f32.mrf.mxu0
  %v376 = vadd.f32 %v326, %v375
  %377 = vmatmul.f32.gmra.mxu0 %v287
  %v378 = vpop.f32.mrf.mxu0
  %v379 = vadd.f32 %v326, %v378
  %380 = vmatmul.f32.gmra.mxu0 %v288
  %v381 = vpop.f32.mrf.mxu0
  %v382 = vadd.f32 %v326, %v381
  %383 = vmatmul.f32.gmra.mxu0 %v289
  %v384 = vpop.f32.mrf.mxu0
  %v385 = vadd.f32 %v326, %v384
  %386 = vmatmul.f32.gmra.mxu0 %v290
  %v387 = vpop.f32.mrf.mxu0
  %v388 = vadd.f32 %v326, %v387
  %389 = vmatmul.f32.gmra.mxu0 %v291
  %v390 = vpop.f32.mrf.mxu0
  %v391 = vadd.f32 %v326, %v390
  %392 = vmatmul.f32.gmra.mxu0 %v292
  %v393 = vpop.f32.mrf.mxu0
  %v394 = vadd.f32 %v326, %v393
  %395 = vmatmul.f32.gmra.mxu0 %v293
  %v396 = vpop.f32.mrf.mxu0
  %v397 = vadd.f32 %v326, %v396
  %398 = vmatmul.f32.gmra.mxu0 %v294
  %v399 = vpop.f32.mrf.mxu0
  %v400 = vadd.f32 %v326, %v399
  %401 = vmatmul.f32.gmra.mxu0 %v295
  %v402 = vpop.f32.mrf.mxu0
  %v403 = vadd.f32 %v326, %v402
  %404 = vmatmul.f32.gmra.mxu0 %v296
  %v405 = vpop.f32.mrf.mxu0
  %v406 = vadd.f32 %v326, %v405
  %407 = vmatmul.f32.gmra.mxu0 %v297
  %v408 = vpop.f32.mrf.mxu0
  %v409 = vadd.f32 %v326, %v408
  %410 = vmatmul.f32.gmra.mxu0 %v298
  %v411 = vpop.f32.mrf.mxu0
  %v412 = vadd.f32 %v326, %v411
  %413 = vmatmul.f32.gmra.mxu0 %v299
  %v414 = vpop.f32.mrf.mxu0
  %v415 = vadd.f32 %v326, %v414
  %416 = vmatmul.f32.gmra.mxu0 %v300
  %v417 = vpop.f32.mrf.mxu0
  %v418 = vadd.f32 %v326, %v417
  %419 = vmatmul.f32.gmra.mxu0 %v301
  %v420 = vpop.f32.mrf.mxu0
  %v421 = vadd.f32 %v326, %v420
  %422 = vmatmul.f32.gmra.mxu0 %v302
  %v423 = vpop.f32.mrf.mxu0
  %v424 = vadd.f32 %v326, %v423
  %425 = vmatmul.f32.gmra.mxu0 %v303
  %v426 = vpop.f32.mrf.mxu0
  %v427 = vadd.f32 %v326, %v426
  %428 = vmatmul.f32.gmra.mxu0 %v304
  %v429 = vpop.f32.mrf.mxu0
  %v430 = vadd.f32 %v326, %v429
  %431 = vmatmul.f32.gmra.mxu0 %v305
  %v432 = vpop.f32.mrf.mxu0
  %v433 = vadd.f32 %v326, %v432
  %434 = vmatmul.f32.gmra.mxu0 %v306
  %v435 = vpop.f32.mrf.mxu0
  %v436 = vadd.f32 %v326, %v435
  %437 = vmatmul.f32.gmra.mxu0 %v307
  %v438 = vpop.f32.mrf.mxu0
  %v439 = vadd.f32 %v326, %v438
  %440 = vdwg.mxu0
  %v441 = vtanh.pop %v346
  %v442 = vtanh.pop %v349
  %v443 = vtanh.pop %v352
  %v444 = vtanh.pop %v355
  %v445 = vtanh.pop %v358
  %v446 = vtanh.pop %v361
  %v447 = vtanh.pop %v364
  %v448 = vtanh.pop %v367
  %v449 = vtanh.pop %v370
  %v450 = vtanh.pop %v373
  %v451 = vtanh.pop %v376
  %v452 = vtanh.pop %v379
  %v453 = vtanh.pop %v382
  %v454 = vtanh.pop %v385
  %v455 = vtanh.pop %v388
  %v456 = vtanh.pop %v391
  %v457 = vtanh.pop %v394
  %v458 = vtanh.pop %v397
  %v459 = vtanh.pop %v400
  %v460 = vtanh.pop %v403
  %v461 = vtanh.pop %v406
  %v462 = vtanh.pop %v409
  %v463 = vtanh.pop %v412
  %v464 = vtanh.pop %v415
  %v465 = vtanh.pop %v418
  %v466 = vtanh.pop %v421
  %v467 = vtanh.pop %v424
  %v468 = vtanh.pop %v427
  %v469 = vtanh.pop %v430
  %v470 = vtanh.pop %v433
  %v471 = vtanh.pop %v436
  %v472 = vtanh.pop %v439
  %v473 = vld [vmem:[%s5] sm:$0xff]
  %v474 = vld [vmem:[%s5 + $0x8] sm:$0xff]
  %v475 = vld [vmem:[%s5 + $0x10] sm:$0xff]
  %v476 = vld [vmem:[%s5 + $0x18] sm:$0xff]
  %v477 = vld [vmem:[%s5 + $0x20] sm:$0xff]
  %v478 = vld [vmem:[%s5 + $0x28] sm:$0xff]
  %v479 = vld [vmem:[%s5 + $0x30] sm:$0xff]
  %v480 = vld [vmem:[%s5 + $0x38] sm:$0xff]
  %v481 = vld [vmem:[%s5 + $0x40] sm:$0xff]
  %v482 = vld [vmem:[%s5 + $0x48] sm:$0xff]
  %v483 = vld [vmem:[%s5 + $0x50] sm:$0xff]
  %v484 = vld [vmem:[%s5 + $0x58] sm:$0xff]
  %v485 = vld [vmem:[%s5 + $0x60] sm:$0xff]
  %v486 = vld [vmem:[%s5 + $0x68] sm:$0xff]
  %v487 = vld [vmem:[%s5 + $0x70] sm:$0xff]
  %v488 = vld [vmem:[%s5 + $0x78] sm:$0xff]
  %v489 = vld [vmem:[%s6] sm:$0x1]
  %v491 = vperm.slane %v489, 0
  %493 = vmatpush.msra.mxu0 %v488
  %494 = vmatpush.msra.mxu0 %v487
  %495 = vmatpush.msra.mxu0 %v486
  %496 = vmatpush.msra.mxu0 %v485
  %497 = vmatpush.msra.mxu0 %v484
  %498 = vmatpush.msra.mxu0 %v483
  %499 = vmatpush.msra.mxu0 %v482
  %500 = vmatpush.msra.mxu0 %v481
  %501 = vmatpush.msra.mxu0 %v480
  %502 = vmatpush.msra.mxu0 %v479
  %503 = vmatpush.msra.mxu0 %v478
  %504 = vmatpush.msra.mxu0 %v477
  %505 = vmatpush.msra.mxu0 %v476
  %506 = vmatpush.msra.mxu0 %v475
  %507 = vmatpush.msra.mxu0 %v474
  %508 = vmatpush.msra.mxu0 %v473
  %509 = vmatmul.f32.gmra.mxu0 %v441
  %v510 = vpop.f32.mrf.mxu0
  %v511 = vadd.f32 %v491, %v510
  %512 = vmatmul.f32.gmra.mxu0 %v442
  %v513 = vpop.f32.mrf.mxu0
  %v514 = vadd.f32 %v491, %v513
  %515 = vmatmul.f32.gmra.mxu0 %v443
  %v516 = vpop.f32.mrf.mxu0
  %v517 = vadd.f32 %v491, %v516
  %518 = vmatmul.f32.gmra.mxu0 %v444
  %v519 = vpop.f32.mrf.mxu0
  %v520 = vadd.f32 %v491, %v519
  %521 = vmatmul.f32.gmra.mxu0 %v445
  %v522 = vpop.f32.mrf.mxu0
  %v523 = vadd.f32 %v491, %v522
  %524 = vmatmul.f32.gmra.mxu0 %v446
  %v525 = vpop.f32.mrf.mxu0
  %v526 = vadd.f32 %v491, %v525
  %527 = vmatmul.f32.gmra.mxu0 %v447
  %v528 = vpop.f32.mrf.mxu0
  %v529 = vadd.f32 %v491, %v528
  %530 = vmatmul.f32.gmra.mxu0 %v448
  %v531 = vpop.f32.mrf.mxu0
  %v532 = vadd.f32 %v491, %v531
  %533 = vmatmul.f32.gmra.mxu0 %v449
  %v534 = vpop.f32.mrf.mxu0
  %v535 = vadd.f32 %v491, %v534
  %536 = vmatmul.f32.gmra.mxu0 %v450
  %v537 = vpop.f32.mrf.mxu0
  %v538 = vadd.f32 %v491, %v537
  %539 = vmatmul.f32.gmra.mxu0 %v451
  %v540 = vpop.f32.mrf.mxu0
  %v541 = vadd.f32 %v491, %v540
  %542 = vmatmul.f32.gmra.mxu0 %v452
  %v543 = vpop.f32.mrf.mxu0
  %v544 = vadd.f32 %v491, %v543
  %545 = vmatmul.f32.gmra.mxu0 %v453
  %v546 = vpop.f32.mrf.mxu0
  %v547 = vadd.f32 %v491, %v546
  %548 = vmatmul.f32.gmra.mxu0 %v454
  %v549 = vpop.f32.mrf.mxu0
  %v550 = vadd.f32 %v491, %v549
  %551 = vmatmul.f32.gmra.mxu0 %v455
  %v552 = vpop.f32.mrf.mxu0
  %v553 = vadd.f32 %v491, %v552
  %554 = vmatmul.f32.gmra.mxu0 %v456
  %v555 = vpop.f32.mrf.mxu0
  %v556 = vadd.f32 %v491, %v555
  %557 = vmatmul.f32.gmra.mxu0 %v457
  %v558 = vpop.f32.mrf.mxu0
  %v559 = vadd.f32 %v491, %v558
  %560 = vmatmul.f32.gmra.mxu0 %v458
  %v561 = vpop.f32.mrf.mxu0
  %v562 = vadd.f32 %v491, %v561
  %563 = vmatmul.f32.gmra.mxu0 %v459
  %v564 = vpop.f32.mrf.mxu0
  %v565 = vadd.f32 %v491, %v564
  %566 = vmatmul.f32.gmra.mxu0 %v460
  %v567 = vpop.f32.mrf.mxu0
  %v568 = vadd.f32 %v491, %v567
  %569 = vmatmul.f32.gmra.mxu0 %v461
  %v570 = vpop.f32.mrf.mxu0
  %v571 = vadd.f32 %v491, %v570
  %572 = vmatmul.f32.gmra.mxu0 %v462
  %v573 = vpop.f32.mrf.mxu0
  %v574 = vadd.f32 %v491, %v573
  %575 = vmatmul.f32.gmra.mxu0 %v463
  %v576 = vpop.f32.mrf.mxu0
  %v577 = vadd.f32 %v491, %v576
  %578 = vmatmul.f32.gmra.mxu0 %v464
  %v579 = vpop.f32.mrf.mxu0
  %v580 = vadd.f32 %v491, %v579
  %581 = vmatmul.f32.gmra.mxu0 %v465
  %v582 = vpop.f32.mrf.mxu0
  %v583 = vadd.f32 %v491, %v582
  %584 = vmatmul.f32.gmra.mxu0 %v466
  %v585 = vpop.f32.mrf.mxu0
  %v586 = vadd.f32 %v491, %v585
  %587 = vmatmul.f32.gmra.mxu0 %v467
  %v588 = vpop.f32.mrf.mxu0
  %v589 = vadd.f32 %v491, %v588
  %590 = vmatmul.f32.gmra.mxu0 %v468
  %v591 = vpop.f32.mrf.mxu0
  %v592 = vadd.f32 %v491, %v591
  %593 = vmatmul.f32.gmra.mxu0 %v469
  %v594 = vpop.f32.mrf.mxu0
  %v595 = vadd.f32 %v491, %v594
  %596 = vmatmul.f32.gmra.mxu0 %v470
  %v597 = vpop.f32.mrf.mxu0
  %v598 = vadd.f32 %v491, %v597
  %599 = vmatmul.f32.gmra.mxu0 %v471
  %v600 = vpop.f32.mrf.mxu0
  %v601 = vadd.f32 %v491, %v600
  %602 = vmatmul.f32.gmra.mxu0 %v472
  %v603 = vpop.f32.mrf.mxu0
  %v604 = vadd.f32 %v491, %v603
  %605 = vdwg.mxu0
  %vm606 = vcmask 130048
  %607 = vst.msk [vmem:[%s7] sm:$0xff] %vm606, %v511
  %608 = vst.msk [vmem:[%s7 + $0x8] sm:$0xff] %vm606, %v514
  %609 = vst.msk [vmem:[%s7 + $0x10] sm:$0xff] %vm606, %v517
  %610 = vst.msk [vmem:[%s7 + $0x18] sm:$0xff] %vm606, %v520
  %611 = vst.msk [vmem:[%s7 + $0x20] sm:$0xff] %vm606, %v523
  %612 = vst.msk [vmem:[%s7 + $0x28] sm:$0xff] %vm606, %v526
  %613 = vst.msk [vmem:[%s7 + $0x30] sm:$0xff] %vm606, %v529
  %614 = vst.msk [vmem:[%s7 + $0x38] sm:$0xff] %vm606, %v532
  %615 = vst.msk [vmem:[%s7 + $0x40] sm:$0xff] %vm606, %v535
  %616 = vst.msk [vmem:[%s7 + $0x48] sm:$0xff] %vm606, %v538
  %617 = vst.msk [vmem:[%s7 + $0x50] sm:$0xff] %vm606, %v541
  %618 = vst.msk [vmem:[%s7 + $0x58] sm:$0xff] %vm606, %v544
  %619 = vst.msk [vmem:[%s7 + $0x60] sm:$0xff] %vm606, %v547
  %620 = vst.msk [vmem:[%s7 + $0x68] sm:$0xff] %vm606, %v550
  %621 = vst.msk [vmem:[%s7 + $0x70] sm:$0xff] %vm606, %v553
  %622 = vst.msk [vmem:[%s7 + $0x78] sm:$0xff] %vm606, %v556
  %623 = vst.msk [vmem:[%s7 + $0x80] sm:$0xff] %vm606, %v559
  %624 = vst.msk [vmem:[%s7 + $0x88] sm:$0xff] %vm606, %v562
  %625 = vst.msk [vmem:[%s7 + $0x90] sm:$0xff] %vm606, %v565
  %626 = vst.msk [vmem:[%s7 + $0x98] sm:$0xff] %vm606, %v568
  %627 = vst.msk [vmem:[%s7 + $0xa0] sm:$0xff] %vm606, %v571
  %628 = vst.msk [vmem:[%s7 + $0xa8] sm:$0xff] %vm606, %v574
  %629 = vst.msk [vmem:[%s7 + $0xb0] sm:$0xff] %vm606, %v577
  %630 = vst.msk [vmem:[%s7 + $0xb8] sm:$0xff] %vm606, %v580
  %631 = vst.msk [vmem:[%s7 + $0xc0] sm:$0xff] %vm606, %v583
  %632 = vst.msk [vmem:[%s7 + $0xc8] sm:$0xff] %vm606, %v586
  %633 = vst.msk [vmem:[%s7 + $0xd0] sm:$0xff] %vm606, %v589
  %634 = vst.msk [vmem:[%s7 + $0xd8] sm:$0xff] %vm606, %v592
  %635 = vst.msk [vmem:[%s7 + $0xe0] sm:$0xff] %vm606, %v595
  %636 = vst.msk [vmem:[%s7 + $0xe8] sm:$0xff] %vm606, %v598
  %637 = vst.msk [vmem:[%s7 + $0xf0] sm:$0xff] %vm606, %v601
  %638 = vst.msk [vmem:[%s7 + $0xf8] sm:$0xff] %vm606, %v604
  // Predicated region
  $region30: #{fcnet_forward.1} parent=0 // pred_check
    _
  $region31: #{fcnet_forward.1} parent=0 // pred_check_branch
    %640 = sbr.rel (0) target = $region33
  $region32: #{fcnet_forward.1} parent=0 // pred_region
    _
  $region33: #{fcnet_forward.1} parent=0 // pred_fallthru
    _
  // Predicated region
  $region34: #{fcnet_forward.1} parent=0 // pred_check
    _
  $region35: #{fcnet_forward.1} parent=0 // pred_check_branch
    %642 = sbr.rel (0) target = $region37
  $region36: #{fcnet_forward.1} parent=0 // pred_region
    _
  $region37: #{fcnet_forward.1} parent=0 // pred_fallthru
    _

</llo_original>
